<compile_context>
chip_gen: v7x
topology: tpu7x:2x2x1
jax: 0.10.0
libtpu: 0.0.40
codegen_flags: <defaults>
</compile_context>

<pallas_src>
import functools

import jax
import jax.numpy as jnp
from jax.experimental import pallas as pl
from jax.experimental.pallas import tpu as pltpu

GATE_CHANNELS = 4


def _channel_gate_kernel(p_ref, x_ref, o_ref, *, C, T, HW):
    """p_ref: packed MLP params in SMEM (f32, 1-D, length C*Ch + Ch + Ch*C + C).
       x_ref: (bt, T, C*HW) input block  -- natural (un-permuted) layout.
       o_ref: (bt, C*T, HW) output block -- (B, C, T, H, W) flattened to (B, C*T, HW)."""
    Ch = C // 2
    OFF_W1 = 0                  # w1[c, j] at c*Ch + j   (w1 is Linear1.weight.T, shape (C, Ch))
    OFF_B1 = OFF_W1 + C * Ch    # b1[j]
    OFF_W2 = OFF_B1 + Ch        # w2[j, c] at j*C + c    (w2 is Linear2.weight.T, shape (Ch, C))
    OFF_B2 = OFF_W2 + Ch * C    # b2[c]

    # ---- global max-pool per channel, in native dtype (no full-block f32 copy) ----
    m = []
    for c in range(C):
        xc = x_ref[:, :, c * HW:(c + 1) * HW]            # (bt, T, HW) lane slice
        mc = jnp.max(xc, axis=2, keepdims=True)          # lane reduce    -> (bt, T, 1)
        mc = jnp.max(mc, axis=1, keepdims=True)          # sublane reduce -> (bt, 1, 1)
        m.append(mc.astype(jnp.float32))

    # ---- Linear(C, C/2) -> ReLU, fully unrolled on the VPU with SMEM scalars ----
    h = []
    for j in range(Ch):
        acc = m[0] * p_ref[OFF_W1 + 0 * Ch + j]
        for c in range(1, C):
            acc = acc + m[c] * p_ref[OFF_W1 + c * Ch + j]
        h.append(jnp.maximum(acc + p_ref[OFF_B1 + j], 0.0))

    # ---- Linear(C/2, C) -> sigmoid gate; scaled, permuted write-out ----
    # Output rows [c*T, (c+1)*T) of the (bt, C*T, HW) block are exactly
    # channel c of the permuted tensor: out[b, c, t, :] = x[b, t, c, :] * scale[b, c].
    for c in range(C):
        att = h[0] * p_ref[OFF_W2 + 0 * C + c]
        for j in range(1, Ch):
            att = att + h[j] * p_ref[OFF_W2 + j * C + c]
        att = att + p_ref[OFF_B2 + c]
        scale_c = jax.nn.sigmoid(att)                    # (bt, 1, 1) f32
        xc = x_ref[:, :, c * HW:(c + 1) * HW]            # cheap VMEM re-read
        o_ref[:, c * T:(c + 1) * T, :] = (xc * scale_c).astype(o_ref.dtype)


def _padded_vmem_bytes(shape, dtype):
    """Approximate VMEM bytes of one pipeline buffer (last two dims tile-padded)."""
    itemsize = jnp.dtype(dtype).itemsize
    sublane = 8 * max(1, 4 // itemsize)                  # f32: 8, bf16: 16, int8: 32
    lead = 1
    for d in shape[:-2]:
        lead *= d
    rows = -(-shape[-2] // sublane) * sublane
    cols = -(-shape[-1] // 128) * 128
    return lead * rows * cols * itemsize


def channel_gate_layer3(x, w1, b1, w2, b2, *, block_payload_target=None):
    """x: (B, T, C, H, W) with C == 4.  Returns (B, C, T, H, W), matching the
    torch module output (permuted x scaled by sigmoid of the max-pool MLP)."""
    B, T, C, H, W = x.shape
    assert C == GATE_CHANNELS
    HW = H * W
    out_dtype = jnp.promote_types(x.dtype, jnp.float32)

    # Free (bitcast) reshapes only -- no HBM transpose.
    x3 = x.reshape(B, T, C * HW)

    # Packed MLP parameters: one tiny f32 vector placed in SMEM.
    params = jnp.concatenate(
        [w1.reshape(-1), b1.reshape(-1), w2.reshape(-1), b2.reshape(-1)]
    ).astype(jnp.float32)

    # ---- generation-aware block sizing / VMEM budget ----
    try:
        vmem_cap = int(pltpu.get_tpu_info().vmem_capacity_bytes)
    except Exception:
        vmem_cap = 64 << 20                              # conservative (v7x) fallback
    vmem_budget = int(vmem_cap * 0.8)                    # headroom for Mosaic scratch
    if block_payload_target is None:
        # ~8 MiB input payload per step on 64 MiB-VMEM chips (v7x), ~16 MiB on v5e/v6e.
        block_payload_target = (8 << 20) if vmem_cap <= (64 << 20) else (16 << 20)

    per_batch_payload = T * C * HW * x.dtype.itemsize
    per_batch_in = _padded_vmem_bytes((1, T, C * HW), x.dtype)
    per_batch_out = _padded_vmem_bytes((1, C * T, HW), out_dtype)
    reserve = 2 << 20

    bt = max(1, block_payload_target // max(per_batch_payload, 1))
    bt_vmem = max(1, (vmem_budget - reserve) // (2 * (per_batch_in + per_batch_out)))
    bt = int(min(B, bt, bt_vmem))
    # >= 4 grid steps when B allows (2 per v7x TensorCore), else >= 2 so both
    # cores of the megacore get work.
    if B >= 4:
        bt = min(bt, max(1, B // 4))
    elif B >= 2:
        bt = min(bt, max(1, B // 2))
    grid = (pl.cdiv(B, bt),)                             # ragged last block is masked

    vmem_need = 2 * bt * (per_batch_in + per_batch_out) + reserve
    vmem_limit = int(min(max(vmem_need, 32 << 20), vmem_cap - (4 << 20)))

    kernel = functools.partial(_channel_gate_kernel, C=C, T=T, HW=HW)

    out3 = pl.pallas_call(
        kernel,
        out_shape=jax.ShapeDtypeStruct((B, C * T, HW), out_dtype),
        grid=grid,
        in_specs=[
            pl.BlockSpec(memory_space=pltpu.MemorySpace.SMEM),      # packed MLP params
            pl.BlockSpec((bt, T, C * HW), lambda b: (b, 0, 0)),     # input batch block
        ],
        out_specs=pl.BlockSpec((bt, C * T, HW), lambda b: (b, 0, 0)),
        compiler_params=pltpu.CompilerParams(
            dimension_semantics=("parallel",),
            vmem_limit_bytes=vmem_limit,
        ),
    )(params, x3)

    # Free reshape back to the torch output shape.
    return out3.reshape(B, C, T, H, W)


def reference(x, w1, b1, w2, b2):
    """Pure-JAX reference mirroring the torch forward exactly."""
    xp = jnp.transpose(x, (0, 2, 1, 3, 4)).astype(jnp.float32)      # (B, C, T, H, W)
    max_p = jnp.max(xp, axis=(2, 3, 4))                             # (B, C)

    def mlp(p):
        return jnp.maximum(p @ w1 + b1, 0.0) @ w2 + b2

    # Torch also computes the avg-pool MLP into channel_att_sum, but `scale`
    # only uses sigmoid(channel_att_raw) of the LAST pool type ('max').
    scale = jax.nn.sigmoid(mlp(max_p))                              # (B, C)
    return xp * scale[:, :, None, None, None]


if __name__ == "__main__":
    key = jax.random.PRNGKey(0)
    k_x, k_w1, k_b1, k_w2, k_b2 = jax.random.split(key, 5)

    # Small shapes consistent with the module: (B, T, C=4, H, W)
    B, T, C, H, W = 2, 8, GATE_CHANNELS, 16, 16
    x = jax.random.normal(k_x, (B, T, C, H, W), dtype=jnp.float32)

    # Deterministic synthetic parameters (Linear weights stored pre-transposed):
    # Linear(4,2): weight.T -> (4,2), bias (2,); Linear(2,4): weight.T -> (2,4), bias (4,).
    w1 = 0.1 * jax.random.normal(k_w1, (C, C // 2), dtype=jnp.float32)
    b1 = 0.1 * jax.random.normal(k_b1, (C // 2,), dtype=jnp.float32)
    w2 = 0.1 * jax.random.normal(k_w2, (C // 2, C), dtype=jnp.float32)
    b2 = 0.1 * jax.random.normal(k_b2, (C,), dtype=jnp.float32)

    out = channel_gate_layer3(x, w1, b1, w2, b2)
    out = jax.block_until_ready(out)

    ref = reference(x, w1, b1, w2, b2)
    assert out.shape == (B, C, T, H, W)
    assert out.dtype == ref.dtype
    assert jnp.allclose(out, ref, atol=1e-5, rtol=1e-5)

    print("KERNEL_OK")
</pallas_src>

<mosaic_0001>
module attributes {stable_mosaic.version = 11 : i64} {
  func.func @_channel_gate_kernel(%arg0: i32, %arg1: memref<22xf32, #tpu.memory_space<smem>>, %arg2: memref<1x8x1024xf32, #tpu.memory_space<vmem>>, %arg3: memref<1x32x256xf32, #tpu.memory_space<vmem>>) attributes {dimension_semantics = [#tpu.dimension_semantics<parallel>], iteration_bounds = array<i64: 2>, scalar_prefetch = 0 : i64, scratch_operands = 0 : i64, tpu.core_type = #tpu.core_type<tc>, window_params = [{transform_indices = @transform_0, window_bounds = array<i64: 22>}, {transform_indices = @transform_1, window_bounds = array<i64: 1, 8, 1024>}, {transform_indices = @transform_2, window_bounds = array<i64: 1, 32, 256>}]} {
    %c0 = arith.constant 0 : index
    %c0_0 = arith.constant 0 : index
    %c0_1 = arith.constant 0 : index
    %0 = vector.load %arg2[%c0, %c0_0, %c0_1] : memref<1x8x1024xf32, #tpu.memory_space<vmem>>, vector<1x8x256xf32>
    %cst = arith.constant dense<0xFF800000> : vector<1x8xf32>
    %1 = vector.multi_reduction <maximumf>, %0, %cst [2] : vector<1x8x256xf32> to vector<1x8xf32>
    %2 = vector.shape_cast %1 : vector<1x8xf32> to vector<1x8x1xf32>
    %cst_2 = arith.constant dense<0xFF800000> : vector<1x1xf32>
    %3 = vector.multi_reduction <maximumf>, %2, %cst_2 [1] : vector<1x8x1xf32> to vector<1x1xf32>
    %4 = vector.shape_cast %3 : vector<1x1xf32> to vector<1x1x1xf32>
    %c0_3 = arith.constant 0 : index
    %c0_4 = arith.constant 0 : index
    %c256 = arith.constant 256 : index
    %5 = vector.load %arg2[%c0_3, %c0_4, %c256] : memref<1x8x1024xf32, #tpu.memory_space<vmem>>, vector<1x8x256xf32>
    %cst_5 = arith.constant dense<0xFF800000> : vector<1x8xf32>
    %6 = vector.multi_reduction <maximumf>, %5, %cst_5 [2] : vector<1x8x256xf32> to vector<1x8xf32>
    %7 = vector.shape_cast %6 : vector<1x8xf32> to vector<1x8x1xf32>
    %cst_6 = arith.constant dense<0xFF800000> : vector<1x1xf32>
    %8 = vector.multi_reduction <maximumf>, %7, %cst_6 [1] : vector<1x8x1xf32> to vector<1x1xf32>
    %9 = vector.shape_cast %8 : vector<1x1xf32> to vector<1x1x1xf32>
    %c0_7 = arith.constant 0 : index
    %c0_8 = arith.constant 0 : index
    %c512 = arith.constant 512 : index
    %10 = vector.load %arg2[%c0_7, %c0_8, %c512] : memref<1x8x1024xf32, #tpu.memory_space<vmem>>, vector<1x8x256xf32>
    %cst_9 = arith.constant dense<0xFF800000> : vector<1x8xf32>
    %11 = vector.multi_reduction <maximumf>, %10, %cst_9 [2] : vector<1x8x256xf32> to vector<1x8xf32>
    %12 = vector.shape_cast %11 : vector<1x8xf32> to vector<1x8x1xf32>
    %cst_10 = arith.constant dense<0xFF800000> : vector<1x1xf32>
    %13 = vector.multi_reduction <maximumf>, %12, %cst_10 [1] : vector<1x8x1xf32> to vector<1x1xf32>
    %14 = vector.shape_cast %13 : vector<1x1xf32> to vector<1x1x1xf32>
    %c0_11 = arith.constant 0 : index
    %c0_12 = arith.constant 0 : index
    %c768 = arith.constant 768 : index
    %15 = vector.load %arg2[%c0_11, %c0_12, %c768] : memref<1x8x1024xf32, #tpu.memory_space<vmem>>, vector<1x8x256xf32>
    %cst_13 = arith.constant dense<0xFF800000> : vector<1x8xf32>
    %16 = vector.multi_reduction <maximumf>, %15, %cst_13 [2] : vector<1x8x256xf32> to vector<1x8xf32>
    %17 = vector.shape_cast %16 : vector<1x8xf32> to vector<1x8x1xf32>
    %cst_14 = arith.constant dense<0xFF800000> : vector<1x1xf32>
    %18 = vector.multi_reduction <maximumf>, %17, %cst_14 [1] : vector<1x8x1xf32> to vector<1x1xf32>
    %19 = vector.shape_cast %18 : vector<1x1xf32> to vector<1x1x1xf32>
    %c0_15 = arith.constant 0 : index
    %20 = memref.load %arg1[%c0_15] : memref<22xf32, #tpu.memory_space<smem>>
    %21 = vector.broadcast %20 : f32 to vector<1x1x1xf32>
    %22 = arith.mulf %4, %21 : vector<1x1x1xf32>
    %c2 = arith.constant 2 : index
    %23 = memref.load %arg1[%c2] : memref<22xf32, #tpu.memory_space<smem>>
    %24 = vector.broadcast %23 : f32 to vector<1x1x1xf32>
    %25 = arith.mulf %9, %24 : vector<1x1x1xf32>
    %26 = arith.addf %22, %25 : vector<1x1x1xf32>
    %c4 = arith.constant 4 : index
    %27 = memref.load %arg1[%c4] : memref<22xf32, #tpu.memory_space<smem>>
    %28 = vector.broadcast %27 : f32 to vector<1x1x1xf32>
    %29 = arith.mulf %14, %28 : vector<1x1x1xf32>
    %30 = arith.addf %26, %29 : vector<1x1x1xf32>
    %c6 = arith.constant 6 : index
    %31 = memref.load %arg1[%c6] : memref<22xf32, #tpu.memory_space<smem>>
    %32 = vector.broadcast %31 : f32 to vector<1x1x1xf32>
    %33 = arith.mulf %19, %32 : vector<1x1x1xf32>
    %34 = arith.addf %30, %33 : vector<1x1x1xf32>
    %c8 = arith.constant 8 : index
    %35 = memref.load %arg1[%c8] : memref<22xf32, #tpu.memory_space<smem>>
    %36 = vector.broadcast %35 : f32 to vector<1x1x1xf32>
    %37 = arith.addf %34, %36 : vector<1x1x1xf32>
    %cst_16 = arith.constant 0.000000e+00 : f32
    %38 = vector.broadcast %cst_16 : f32 to vector<1x1x1xf32>
    %39 = arith.maximumf %37, %38 : vector<1x1x1xf32>
    %c1 = arith.constant 1 : index
    %40 = memref.load %arg1[%c1] : memref<22xf32, #tpu.memory_space<smem>>
    %41 = vector.broadcast %40 : f32 to vector<1x1x1xf32>
    %42 = arith.mulf %4, %41 : vector<1x1x1xf32>
    %c3 = arith.constant 3 : index
    %43 = memref.load %arg1[%c3] : memref<22xf32, #tpu.memory_space<smem>>
    %44 = vector.broadcast %43 : f32 to vector<1x1x1xf32>
    %45 = arith.mulf %9, %44 : vector<1x1x1xf32>
    %46 = arith.addf %42, %45 : vector<1x1x1xf32>
    %c5 = arith.constant 5 : index
    %47 = memref.load %arg1[%c5] : memref<22xf32, #tpu.memory_space<smem>>
    %48 = vector.broadcast %47 : f32 to vector<1x1x1xf32>
    %49 = arith.mulf %14, %48 : vector<1x1x1xf32>
    %50 = arith.addf %46, %49 : vector<1x1x1xf32>
    %c7 = arith.constant 7 : index
    %51 = memref.load %arg1[%c7] : memref<22xf32, #tpu.memory_space<smem>>
    %52 = vector.broadcast %51 : f32 to vector<1x1x1xf32>
    %53 = arith.mulf %19, %52 : vector<1x1x1xf32>
    %54 = arith.addf %50, %53 : vector<1x1x1xf32>
    %c9 = arith.constant 9 : index
    %55 = memref.load %arg1[%c9] : memref<22xf32, #tpu.memory_space<smem>>
    %56 = vector.broadcast %55 : f32 to vector<1x1x1xf32>
    %57 = arith.addf %54, %56 : vector<1x1x1xf32>
    %cst_17 = arith.constant 0.000000e+00 : f32
    %58 = vector.broadcast %cst_17 : f32 to vector<1x1x1xf32>
    %59 = arith.maximumf %57, %58 : vector<1x1x1xf32>
    %c10 = arith.constant 10 : index
    %60 = memref.load %arg1[%c10] : memref<22xf32, #tpu.memory_space<smem>>
    %61 = vector.broadcast %60 : f32 to vector<1x1x1xf32>
    %62 = arith.mulf %39, %61 : vector<1x1x1xf32>
    %c14 = arith.constant 14 : index
    %63 = memref.load %arg1[%c14] : memref<22xf32, #tpu.memory_space<smem>>
    %64 = vector.broadcast %63 : f32 to vector<1x1x1xf32>
    %65 = arith.mulf %59, %64 : vector<1x1x1xf32>
    %66 = arith.addf %62, %65 : vector<1x1x1xf32>
    %c18 = arith.constant 18 : index
    %67 = memref.load %arg1[%c18] : memref<22xf32, #tpu.memory_space<smem>>
    %68 = vector.broadcast %67 : f32 to vector<1x1x1xf32>
    %69 = arith.addf %66, %68 : vector<1x1x1xf32>
    %70 = arith.negf %69 : vector<1x1x1xf32>
    %71 = math.exp %70 : vector<1x1x1xf32>
    %cst_18 = arith.constant 1.000000e+00 : f32
    %72 = vector.broadcast %cst_18 : f32 to vector<1x1x1xf32>
    %73 = arith.addf %72, %71 : vector<1x1x1xf32>
    %74 = arith.divf %72, %73 : vector<1x1x1xf32>
    %c0_19 = arith.constant 0 : index
    %c0_20 = arith.constant 0 : index
    %c0_21 = arith.constant 0 : index
    %75 = vector.load %arg2[%c0_19, %c0_20, %c0_21] : memref<1x8x1024xf32, #tpu.memory_space<vmem>>, vector<1x8x256xf32>
    %76 = vector.broadcast %74 : vector<1x1x1xf32> to vector<1x8x256xf32>
    %77 = arith.mulf %75, %76 : vector<1x8x256xf32>
    %c0_22 = arith.constant 0 : index
    %c0_23 = arith.constant 0 : index
    %c0_24 = arith.constant 0 : index
    %78 = vector.load %arg3[%c0_22, %c0_23, %c0_24] : memref<1x32x256xf32, #tpu.memory_space<vmem>>, vector<1x8x256xf32>
    tpu.vector_store %arg3[%c0_22, %c0_23, %c0_24], %77 {strides = array<i32>} : memref<1x32x256xf32, #tpu.memory_space<vmem>>, vector<1x8x256xf32>,
    %c11 = arith.constant 11 : index
    %79 = memref.load %arg1[%c11] : memref<22xf32, #tpu.memory_space<smem>>
    %80 = vector.broadcast %79 : f32 to vector<1x1x1xf32>
    %81 = arith.mulf %39, %80 : vector<1x1x1xf32>
    %c15 = arith.constant 15 : index
    %82 = memref.load %arg1[%c15] : memref<22xf32, #tpu.memory_space<smem>>
    %83 = vector.broadcast %82 : f32 to vector<1x1x1xf32>
    %84 = arith.mulf %59, %83 : vector<1x1x1xf32>
    %85 = arith.addf %81, %84 : vector<1x1x1xf32>
    %c19 = arith.constant 19 : index
    %86 = memref.load %arg1[%c19] : memref<22xf32, #tpu.memory_space<smem>>
    %87 = vector.broadcast %86 : f32 to vector<1x1x1xf32>
    %88 = arith.addf %85, %87 : vector<1x1x1xf32>
    %89 = arith.negf %88 : vector<1x1x1xf32>
    %90 = math.exp %89 : vector<1x1x1xf32>
    %cst_25 = arith.constant 1.000000e+00 : f32
    %91 = vector.broadcast %cst_25 : f32 to vector<1x1x1xf32>
    %92 = arith.addf %91, %90 : vector<1x1x1xf32>
    %93 = arith.divf %91, %92 : vector<1x1x1xf32>
    %c0_26 = arith.constant 0 : index
    %c0_27 = arith.constant 0 : index
    %c256_28 = arith.constant 256 : index
    %94 = vector.load %arg2[%c0_26, %c0_27, %c256_28] : memref<1x8x1024xf32, #tpu.memory_space<vmem>>, vector<1x8x256xf32>
    %95 = vector.broadcast %93 : vector<1x1x1xf32> to vector<1x8x256xf32>
    %96 = arith.mulf %94, %95 : vector<1x8x256xf32>
    %c0_29 = arith.constant 0 : index
    %c8_30 = arith.constant 8 : index
    %c0_31 = arith.constant 0 : index
    %97 = vector.load %arg3[%c0_29, %c8_30, %c0_31] : memref<1x32x256xf32, #tpu.memory_space<vmem>>, vector<1x8x256xf32>
    tpu.vector_store %arg3[%c0_29, %c8_30, %c0_31], %96 {strides = array<i32>} : memref<1x32x256xf32, #tpu.memory_space<vmem>>, vector<1x8x256xf32>,
    %c12 = arith.constant 12 : index
    %98 = memref.load %arg1[%c12] : memref<22xf32, #tpu.memory_space<smem>>
    %99 = vector.broadcast %98 : f32 to vector<1x1x1xf32>
    %100 = arith.mulf %39, %99 : vector<1x1x1xf32>
    %c16 = arith.constant 16 : index
    %101 = memref.load %arg1[%c16] : memref<22xf32, #tpu.memory_space<smem>>
    %102 = vector.broadcast %101 : f32 to vector<1x1x1xf32>
    %103 = arith.mulf %59, %102 : vector<1x1x1xf32>
    %104 = arith.addf %100, %103 : vector<1x1x1xf32>
    %c20 = arith.constant 20 : index
    %105 = memref.load %arg1[%c20] : memref<22xf32, #tpu.memory_space<smem>>
    %106 = vector.broadcast %105 : f32 to vector<1x1x1xf32>
    %107 = arith.addf %104, %106 : vector<1x1x1xf32>
    %108 = arith.negf %107 : vector<1x1x1xf32>
    %109 = math.exp %108 : vector<1x1x1xf32>
    %cst_32 = arith.constant 1.000000e+00 : f32
    %110 = vector.broadcast %cst_32 : f32 to vector<1x1x1xf32>
    %111 = arith.addf %110, %109 : vector<1x1x1xf32>
    %112 = arith.divf %110, %111 : vector<1x1x1xf32>
    %c0_33 = arith.constant 0 : index
    %c0_34 = arith.constant 0 : index
    %c512_35 = arith.constant 512 : index
    %113 = vector.load %arg2[%c0_33, %c0_34, %c512_35] : memref<1x8x1024xf32, #tpu.memory_space<vmem>>, vector<1x8x256xf32>
    %114 = vector.broadcast %112 : vector<1x1x1xf32> to vector<1x8x256xf32>
    %115 = arith.mulf %113, %114 : vector<1x8x256xf32>
    %c0_36 = arith.constant 0 : index
    %c16_37 = arith.constant 16 : index
    %c0_38 = arith.constant 0 : index
    %116 = vector.load %arg3[%c0_36, %c16_37, %c0_38] : memref<1x32x256xf32, #tpu.memory_space<vmem>>, vector<1x8x256xf32>
    tpu.vector_store %arg3[%c0_36, %c16_37, %c0_38], %115 {strides = array<i32>} : memref<1x32x256xf32, #tpu.memory_space<vmem>>, vector<1x8x256xf32>,
    %c13 = arith.constant 13 : index
    %117 = memref.load %arg1[%c13] : memref<22xf32, #tpu.memory_space<smem>>
    %118 = vector.broadcast %117 : f32 to vector<1x1x1xf32>
    %119 = arith.mulf %39, %118 : vector<1x1x1xf32>
    %c17 = arith.constant 17 : index
    %120 = memref.load %arg1[%c17] : memref<22xf32, #tpu.memory_space<smem>>
    %121 = vector.broadcast %120 : f32 to vector<1x1x1xf32>
    %122 = arith.mulf %59, %121 : vector<1x1x1xf32>
    %123 = arith.addf %119, %122 : vector<1x1x1xf32>
    %c21 = arith.constant 21 : index
    %124 = memref.load %arg1[%c21] : memref<22xf32, #tpu.memory_space<smem>>
    %125 = vector.broadcast %124 : f32 to vector<1x1x1xf32>
    %126 = arith.addf %123, %125 : vector<1x1x1xf32>
    %127 = arith.negf %126 : vector<1x1x1xf32>
    %128 = math.exp %127 : vector<1x1x1xf32>
    %cst_39 = arith.constant 1.000000e+00 : f32
    %129 = vector.broadcast %cst_39 : f32 to vector<1x1x1xf32>
    %130 = arith.addf %129, %128 : vector<1x1x1xf32>
    %131 = arith.divf %129, %130 : vector<1x1x1xf32>
    %c0_40 = arith.constant 0 : index
    %c0_41 = arith.constant 0 : index
    %c768_42 = arith.constant 768 : index
    %132 = vector.load %arg2[%c0_40, %c0_41, %c768_42] : memref<1x8x1024xf32, #tpu.memory_space<vmem>>, vector<1x8x256xf32>
    %133 = vector.broadcast %131 : vector<1x1x1xf32> to vector<1x8x256xf32>
    %134 = arith.mulf %132, %133 : vector<1x8x256xf32>
    %c0_43 = arith.constant 0 : index
    %c24 = arith.constant 24 : index
    %c0_44 = arith.constant 0 : index
    %135 = vector.load %arg3[%c0_43, %c24, %c0_44] : memref<1x32x256xf32, #tpu.memory_space<vmem>>, vector<1x8x256xf32>
    tpu.vector_store %arg3[%c0_43, %c24, %c0_44], %134 {strides = array<i32>} : memref<1x32x256xf32, #tpu.memory_space<vmem>>, vector<1x8x256xf32>,
    return
  }
  func.func @transform_0(%arg0: i32) -> i32 {
    %c0_i32 = arith.constant 0 : i32
    %c0_i32_0 = arith.constant 0 : i32
    return %c0_i32 : i32
  }
  func.func @transform_1(%arg0: i32) -> (i32, i32, i32) {
    %c0_i32 = arith.constant 0 : i32
    %c0_i32_0 = arith.constant 0 : i32
    %c0_i32_1 = arith.constant 0 : i32
    return %arg0, %c0_i32, %c0_i32_0 : i32, i32, i32
  }
  func.func @transform_2(%arg0: i32) -> (i32, i32, i32) {
    %c0_i32 = arith.constant 0 : i32
    %c0_i32_0 = arith.constant 0 : i32
    %c0_i32_1 = arith.constant 0 : i32
    return %arg0, %c0_i32, %c0_i32_0 : i32, i32, i32
  }
}

</mosaic_0001>

<llo_original>
// kernel: tpu_custom_call.1
$region0: #{tpu_custom_call.1}
  #allocation0 [shape = 'u32[]', space=smem, size = 0x4, offset = 0x4, fixed_abs, tag = 'smem constant byte address 0x4 - core index']
  #allocation1 [shape = 'u32[144,128]{1,0:T(1,128)}', space=vmem, size = 0x12000, scoped, tag = 'internal scratch']
  %s0 = inlined_call_operand.hbm [shape: f32[22], index: 0, kind: input, shape index: {}]
  %s1 = inlined_call_operand.hbm [shape: f32[2,8,1024], index: 1, kind: input, shape index: {}]
  %s2 = inlined_call_operand.hbm [shape: f32[2,32,256], index: 2, kind: output, shape index: {}]
  %s3 = sld [smem:[#allocation0]]
  $region49: #{tpu_custom_call.1} parent=0
    _
  %s5 = ssub.s32 1, %s3
  %s6 = scalar_select 0, %s5, %s3
  $region1: #{tpu_custom_call.1} parent=0
    #allocation2 [shape = 'u8[512]{0}', space=smem, size = 0x200, scoped, tag = 'input window, operand 0, single buffered']
    #allocation3 [shape = 's32[2]{0}', space=sflag, size = 0x8, scoped, tag = 'scoped memory for tpu_custom_call.1']
    #allocation4 [shape = 's32[2]{0}', space=sflag, size = 0x8, scoped, tag = 'scoped memory for tpu_custom_call.1']
    #allocation5 [shape = 's32[2]{0}', space=sflag, size = 0x8, scoped, tag = 'scoped memory for tpu_custom_call.1']
    #allocation6 [shape = 'u8[65536]{0}', space=vmem, size = 0x10000, scoped, tag = 'input window, operand 1']
    #allocation7 [shape = 'u8[65536]{0}', space=vmem, size = 0x10000, scoped, tag = 'output window, operand 0']
    %7 = vsyncpa [#allocation5], 0
    %8 = vsyncpa [#allocation3], 0
    %s9 = scalar_lea.sflag [#allocation3], 1
    %10 = vsyncpa %s9, 0
    %11 = vsyncpa [#allocation4], 0
    %s12 = scalar_lea.sflag [#allocation4], 1
    %13 = vsyncpa %s12, 0
    loop: start=0, step=1, limit=4
    $region2: #{tpu_custom_call.1} parent=1 // loop_pre_header
      _
    $region3: #{tpu_custom_call.1} parent=1 // loop_header
      %s15 = sphi 0, %s19
      %p16 = scmp.ge.s32.totalorder %s15, 4
      %s23 = sphi 0, %s23
      %s25 = sphi 0, %s23
      %s26 = sphi 0, %s25
      %s40 = sphi 0, %s26
      %s46 = sphi 0, %s48
      %s49 = sphi 0, %s46
      %s50 = sphi 0, %s49
      %s66 = sphi 0, %s50
      %s72 = sphi 0, %s74
      %s75 = sphi 0, %s72
      %s76 = sphi 0, %s75
      %s92 = sphi 0, %s76
    $region4: #{tpu_custom_call.1} parent=1 // loop_header_branch
      %18 = sbr.rel (%p16) target = $region8
    $region5: #{tpu_custom_call.1} parent=1 // loop_body
      %s20 = ssub.s32 %s15, 1
      %s21 = ssub.s32 %s15, 2
      %s22 = sadd.s32 %s15, 1
      %s24 = sadd.s32 %s23, 1
      %p27 = scmp.eq.s32.totalorder %s15, 1
      %p28 = scmp.ne.s32.totalorder %s23, %s25
      %p29 = scmp.eq.s32.totalorder %s15, 0
      %p30 = por %p28, %p29
      %p31 = scmp.ne.s32.totalorder %s23, %s25
      %p32 = scmp.eq.s32.totalorder %s20, 1
      %p33 = por %p31, %p32
      %p34 = scmp.ne.s32.totalorder %s25, %s26
      %p35 = scmp.eq.s32.totalorder %s20, 0
      %p36 = por %p34, %p35
      %p37 = scmp.ne.s32.totalorder %s25, %s26
      %p38 = scmp.eq.s32.totalorder %s21, 1
      %p39 = por %p37, %p38
      %p41 = scmp.ne.s32.totalorder %s26, %s40
      %p42 = scmp.eq.s32.totalorder %s21, 0
      %p43 = por %p41, %p42
      %s44 = ssub.s32 %s15, %s22
      %p45 = scmp.eq.s32.totalorder %s44, 0
      %s47 = sadd.s32 %s46, 1
      %s48 = scalar_select %p45, %s46, %s47
      %p51 = pneg %p45
      %p52 = scmp.eq.s32.totalorder %s15, 1
      %p53 = por %p51, %p52
      %p54 = scmp.ne.s32.totalorder %s46, %s49
      %p55 = scmp.eq.s32.totalorder %s15, 0
      %p56 = por %p54, %p55
      %p57 = scmp.ne.s32.totalorder %s46, %s49
      %p58 = scmp.eq.s32.totalorder %s20, 1
      %p59 = por %p57, %p58
      %p60 = scmp.ne.s32.totalorder %s49, %s50
      %p61 = scmp.eq.s32.totalorder %s20, 0
      %p62 = por %p60, %p61
      %p63 = scmp.ne.s32.totalorder %s49, %s50
      %p64 = scmp.eq.s32.totalorder %s21, 1
      %p65 = por %p63, %p64
      %p67 = scmp.ne.s32.totalorder %s50, %s66
      %p68 = scmp.eq.s32.totalorder %s21, 0
      %p69 = por %p67, %p68
      %s70 = ssub.s32 %s15, %s22
      %p71 = scmp.eq.s32.totalorder %s70, 0
      %s73 = sadd.s32 %s72, 1
      %s74 = scalar_select %p71, %s72, %s73
      %p77 = pneg %p71
      %p78 = scmp.eq.s32.totalorder %s15, 1
      %p79 = por %p77, %p78
      %p80 = scmp.ne.s32.totalorder %s72, %s75
      %p81 = scmp.eq.s32.totalorder %s15, 0
      %p82 = por %p80, %p81
      %p83 = scmp.ne.s32.totalorder %s72, %s75
      %p84 = scmp.eq.s32.totalorder %s20, 1
      %p85 = por %p83, %p84
      %p86 = scmp.ne.s32.totalorder %s75, %s76
      %p87 = scmp.eq.s32.totalorder %s20, 0
      %p88 = por %p86, %p87
      %p89 = scmp.ne.s32.totalorder %s75, %s76
      %p90 = scmp.eq.s32.totalorder %s21, 1
      %p91 = por %p89, %p90
      %p93 = scmp.ne.s32.totalorder %s76, %s92
      %p94 = scmp.eq.s32.totalorder %s21, 0
      %p95 = por %p93, %p94
      %p96 = scmp.le.s32.totalorder 1, %s15
      %p97 = scmp.lt.s32.totalorder %s15, 3
      %p98 = pnand %p96, %p97
      %p99 = pneg %p98
      // Predicated region
      $region9: #{tpu_custom_call.1} parent=5 // pred_check
        _
      $region10: #{tpu_custom_call.1} parent=5 // pred_check_branch
        %101 = sbr.rel (%p98) target = $region12
      $region11: #{tpu_custom_call.1} parent=5 // pred_region
        %s102 = ssub.s32 %s15, 1
        // Predicated region
        $region13: #{tpu_custom_call.1} parent=11 // pred_check
          %p103 = pneg %p36
        $region14: #{tpu_custom_call.1} parent=11 // pred_check_branch
          %105 = sbr.rel (%p103) target = $region16
        $region15: #{tpu_custom_call.1} parent=11 // pred_region
          %s107 = ssub.s32 16, 16
          %108 = vsyncadd [#allocation5], %s107
          %111 = dma.hbm_to_smem %s0, 16, [#allocation2], [#allocation5]
        $region16: #{tpu_custom_call.1} parent=11 // pred_fallthru
          _
      $region12: #{tpu_custom_call.1} parent=5 // pred_fallthru
        _
      %p112 = scmp.lt.s32.totalorder %s15, 2
      // Predicated region
      $region17: #{tpu_custom_call.1} parent=5 // pred_check
        %p113 = pneg %p112
      $region18: #{tpu_custom_call.1} parent=5 // pred_check_branch
        %115 = sbr.rel (%p113) target = $region20
      $region19: #{tpu_custom_call.1} parent=5 // pred_region
        // Predicated region
        $region21: #{tpu_custom_call.1} parent=19 // pred_check
          %p116 = pneg %p56
        $region22: #{tpu_custom_call.1} parent=19 // pred_check_branch
          %118 = sbr.rel (%p116) target = $region24
        $region23: #{tpu_custom_call.1} parent=19 // pred_region
          %s119 = sand.u32 %s46, 1
          %s120 = scalar_lea.sflag [#allocation3], %s119
          %s121 = sand.u32 %s46, 1
          %s122 = smul.addr %s121, 64
          %s123 = scalar_lea.vmem [#allocation6], %s122
          %s125 = ssub.s32 1024, 1024
          %126 = vsyncadd %s120, %s125
          %s127 = smul.addr %s15, 8
          %s128 = smul.addr %s127, 128
          %s129 = scalar_lea.hbm %s1, %s128
          %s131 = sshll.u32 %s123, 4
          %s132 = int_to_ptr.vmem [resolvable:$true] %s131
          %134 = dma.hbm_to_vmem [thread:$0]  %s129, 1024, %s132, %s120
        $region24: #{tpu_custom_call.1} parent=19 // pred_fallthru
          _
      $region20: #{tpu_custom_call.1} parent=5 // pred_fallthru
        _
      %p135 = scmp.le.s32.totalorder 1, %s15
      %p136 = scmp.lt.s32.totalorder %s15, 3
      %p137 = pnand %p135, %p136
      %p138 = pneg %p137
      // Predicated region
      $region25: #{tpu_custom_call.1} parent=5 // pred_check
        _
      $region26: #{tpu_custom_call.1} parent=5 // pred_check_branch
        %140 = sbr.rel (%p137) target = $region28
      $region27: #{tpu_custom_call.1} parent=5 // pred_region
        %s141 = ssub.s32 %s15, 1
        // Predicated region
        $region29: #{tpu_custom_call.1} parent=27 // pred_check
          %p142 = pneg %p36
        $region30: #{tpu_custom_call.1} parent=27 // pred_check_branch
          %144 = sbr.rel (%p142) target = $region32
        $region31: #{tpu_custom_call.1} parent=27 // pred_region
          %145 = dma.done [#allocation5], 16
        $region32: #{tpu_custom_call.1} parent=27 // pred_fallthru
          _
        %s146 = sand.u32 %s49, 1
        %s147 = scalar_lea.sflag [#allocation3], %s146
        %s148 = sand.u32 %s49, 1
        %s149 = smul.addr %s148, 64
        %s150 = scalar_lea.vmem [#allocation6], %s149
        // Predicated region
        $region33: #{tpu_custom_call.1} parent=27 // pred_check
          %p151 = pneg %p62
        $region34: #{tpu_custom_call.1} parent=27 // pred_check_branch
          %153 = sbr.rel (%p151) target = $region36
        $region35: #{tpu_custom_call.1} parent=27 // pred_region
          %154 = dma.done %s147, 1024
        $region36: #{tpu_custom_call.1} parent=27 // pred_fallthru
          _
        %155 = sfence
        %p156 = pneg %p36
        %p157 = pneg %p33
        %s158 = sand.u32 %s49, 1
        %s159 = scalar_lea.sflag [#allocation3], %s158
        %s160 = sand.u32 %s49, 1
        %s161 = smul.addr %s160, 64
        %s162 = scalar_lea.vmem [#allocation6], %s161
        %p163 = pneg %p62
        %p164 = pneg %p59
        %p165 = pneg %p88
        %p166 = pneg %p85
        %s167 = sand.u32 %s75, 1
        %s168 = scalar_lea.sflag [#allocation4], %s167
        %s169 = sand.u32 %s75, 1
        %s170 = smul.addr %s169, 64
        %s171 = scalar_lea.vmem [#allocation7], %s170
        %v172 = vld [vmem:[%s150] sm:$0xff]
        %v173 = vld [vmem:[%s150 + $0x8] sm:$0xff]
        %v174 = vmax.f32 %v172, %v173
        %175 = vmax.xlane.f32.xlu0 %v174
        %v176 = vpop.xlane.xlu0 %175
        %v177 = vrot.slane %v176, 4
        %v178 = vmax.f32 %v176, %v177
        %v179 = vrot.slane %v178, 2
        %v180 = vmax.f32 %v178, %v179
        %v181 = vrot.slane %v180, 1
        %v182 = vmax.f32 %v180, %v181
        %v183 = vld [vmem:[%s150 + $0x10] sm:$0xff]
        %v184 = vld [vmem:[%s150 + $0x18] sm:$0xff]
        %v185 = vmax.f32 %v183, %v184
        %186 = vmax.xlane.f32.xlu0 %v185
        %v187 = vpop.xlane.xlu0 %186
        %v188 = vrot.slane %v187, 4
        %v189 = vmax.f32 %v187, %v188
        %v190 = vrot.slane %v189, 2
        %v191 = vmax.f32 %v189, %v190
        %v192 = vrot.slane %v191, 1
        %v193 = vmax.f32 %v191, %v192
        %v194 = vld [vmem:[%s150 + $0x20] sm:$0xff]
        %v195 = vld [vmem:[%s150 + $0x28] sm:$0xff]
        %v196 = vmax.f32 %v194, %v195
        %197 = vmax.xlane.f32.xlu0 %v196
        %v198 = vpop.xlane.xlu0 %197
        %v199 = vrot.slane %v198, 4
        %v200 = vmax.f32 %v198, %v199
        %v201 = vrot.slane %v200, 2
        %v202 = vmax.f32 %v200, %v201
        %v203 = vrot.slane %v202, 1
        %v204 = vmax.f32 %v202, %v203
        %v205 = vld [vmem:[%s150 + $0x30] sm:$0xff]
        %v206 = vld [vmem:[%s150 + $0x38] sm:$0xff]
        %v207 = vmax.f32 %v205, %v206
        %208 = vmax.xlane.f32.xlu0 %v207
        %v209 = vpop.xlane.xlu0 %208
        %v210 = vrot.slane %v209, 4
        %v211 = vmax.f32 %v209, %v210
        %v212 = vrot.slane %v211, 2
        %v213 = vmax.f32 %v211, %v212
        %v214 = vrot.slane %v213, 1
        %v215 = vmax.f32 %v213, %v214
        %s216 = sld [smem:[#allocation2]]
        %v217 = vstv %s216
        %v218 = vmul.f32 %v182, %v217
        %s219 = sld [smem:[#allocation2 + $0x2]]
        %v220 = vstv %s219
        %v221 = vmul.f32 %v193, %v220
        %v222 = vadd.f32 %v218, %v221
        %s223 = sld [smem:[#allocation2 + $0x4]]
        %v224 = vstv %s223
        %v225 = vmul.f32 %v204, %v224
        %v226 = vadd.f32 %v222, %v225
        %s227 = sld [smem:[#allocation2 + $0x6]]
        %v228 = vstv %s227
        %v229 = vmul.f32 %v215, %v228
        %v230 = vadd.f32 %v226, %v229
        %s231 = sld [smem:[#allocation2 + $0x8]]
        %v232 = vstv %s231
        %v233 = vadd.f32 %v230, %v232
        %v234 = vmax.f32 %v233, 0.0
        %s235 = sld [smem:[#allocation2 + $0x1]]
        %v236 = vstv %s235
        %v237 = vmul.f32 %v182, %v236
        %s238 = sld [smem:[#allocation2 + $0x3]]
        %v239 = vstv %s238
        %v240 = vmul.f32 %v193, %v239
        %v241 = vadd.f32 %v237, %v240
        %s242 = sld [smem:[#allocation2 + $0x5]]
        %v243 = vstv %s242
        %v244 = vmul.f32 %v204, %v243
        %v245 = vadd.f32 %v241, %v244
        %s246 = sld [smem:[#allocation2 + $0x7]]
        %v247 = vstv %s246
        %v248 = vmul.f32 %v215, %v247
        %v249 = vadd.f32 %v245, %v248
        %s250 = sld [smem:[#allocation2 + $0x9]]
        %v251 = vstv %s250
        %v252 = vadd.f32 %v249, %v251
        %v253 = vmax.f32 %v252, 0.0
        %s254 = sld [smem:[#allocation2 + $0xa]]
        %v255 = vstv %s254
        %v256 = vmul.f32 %v234, %v255
        %s257 = sld [smem:[#allocation2 + $0xe]]
        %v258 = vstv %s257
        %v259 = vmul.f32 %v253, %v258
        %v260 = vadd.f32 %v256, %v259
        %s261 = sld [smem:[#allocation2 + $0x12]]
        %v262 = vstv %s261
        %v263 = vadd.f32 %v260, %v262
        %v264 = vxor.u32 %v263, 2147483648
        %v265 = vmul.f32 %v264, 1.442695
        %v266 = vpow.pop %v265
        %v267 = vadd.f32 %v266, 1.0
        %v268 = vrcp.pop %v267
        %v269 = vmul.f32 1.0, %v268
        %v270 = vmul.f32 %v172, %v269
        %v271 = vmul.f32 %v173, %v269
        %272 = vst [vmem:[%s171] sm:$0xff] %v270
        %273 = vst [vmem:[%s171 + $0x8] sm:$0xff] %v271
        %s274 = sld [smem:[#allocation2 + $0xb]]
        %v275 = vstv %s274
        %v276 = vmul.f32 %v234, %v275
        %s277 = sld [smem:[#allocation2 + $0xf]]
        %v278 = vstv %s277
        %v279 = vmul.f32 %v253, %v278
        %v280 = vadd.f32 %v276, %v279
        %s281 = sld [smem:[#allocation2 + $0x13]]
        %v282 = vstv %s281
        %v283 = vadd.f32 %v280, %v282
        %v284 = vxor.u32 %v283, 2147483648
        %v285 = vmul.f32 %v284, 1.442695
        %v286 = vpow.pop %v285
        %v287 = vadd.f32 %v286, 1.0
        %v288 = vrcp.pop %v287
        %v289 = vmul.f32 1.0, %v288
        %v290 = vld [vmem:[%s150 + $0x10] sm:$0xff]
        %v291 = vld [vmem:[%s150 + $0x18] sm:$0xff]
        %v292 = vmul.f32 %v290, %v289
        %v293 = vmul.f32 %v291, %v289
        %294 = vst [vmem:[%s171 + $0x10] sm:$0xff] %v292
        %295 = vst [vmem:[%s171 + $0x18] sm:$0xff] %v293
        %s296 = sld [smem:[#allocation2 + $0xc]]
        %v297 = vstv %s296
        %v298 = vmul.f32 %v234, %v297
        %s299 = sld [smem:[#allocation2 + $0x10]]
        %v300 = vstv %s299
        %v301 = vmul.f32 %v253, %v300
        %v302 = vadd.f32 %v298, %v301
        %s303 = sld [smem:[#allocation2 + $0x14]]
        %v304 = vstv %s303
        %v305 = vadd.f32 %v302, %v304
        %v306 = vxor.u32 %v305, 2147483648
        %v307 = vmul.f32 %v306, 1.442695
        %v308 = vpow.pop %v307
        %v309 = vadd.f32 %v308, 1.0
        %v310 = vrcp.pop %v309
        %v311 = vmul.f32 1.0, %v310
        %v312 = vld [vmem:[%s150 + $0x20] sm:$0xff]
        %v313 = vld [vmem:[%s150 + $0x28] sm:$0xff]
        %v314 = vmul.f32 %v312, %v311
        %v315 = vmul.f32 %v313, %v311
        %316 = vst [vmem:[%s171 + $0x20] sm:$0xff] %v314
        %317 = vst [vmem:[%s171 + $0x28] sm:$0xff] %v315
        %s318 = sld [smem:[#allocation2 + $0xd]]
        %v319 = vstv %s318
        %v320 = vmul.f32 %v234, %v319
        %s321 = sld [smem:[#allocation2 + $0x11]]
        %v322 = vstv %s321
        %v323 = vmul.f32 %v253, %v322
        %v324 = vadd.f32 %v320, %v323
        %s325 = sld [smem:[#allocation2 + $0x15]]
        %v326 = vstv %s325
        %v327 = vadd.f32 %v324, %v326
        %v328 = vxor.u32 %v327, 2147483648
        %v329 = vmul.f32 %v328, 1.442695
        %v330 = vpow.pop %v329
        %v331 = vadd.f32 %v330, 1.0
        %v332 = vrcp.pop %v331
        %v333 = vmul.f32 1.0, %v332
        %v334 = vld [vmem:[%s150 + $0x30] sm:$0xff]
        %v335 = vld [vmem:[%s150 + $0x38] sm:$0xff]
        %v336 = vmul.f32 %v334, %v333
        %v337 = vmul.f32 %v335, %v333
        %338 = vst [vmem:[%s171 + $0x30] sm:$0xff] %v336
        %339 = vst [vmem:[%s171 + $0x38] sm:$0xff] %v337
        %s340 = sand.u32 %s75, 1
        %s341 = scalar_lea.sflag [#allocation4], %s340
        %s342 = sand.u32 %s75, 1
        %s343 = smul.addr %s342, 64
        %s344 = scalar_lea.vmem [#allocation7], %s343
        // Predicated region
        $region37: #{tpu_custom_call.1} parent=27 // pred_check
          %p345 = pneg %p85
        $region38: #{tpu_custom_call.1} parent=27 // pred_check_branch
          %347 = sbr.rel (%p345) target = $region40
        $region39: #{tpu_custom_call.1} parent=27 // pred_region
          %s349 = ssub.s32 1024, 1024
          %350 = vsyncadd %s341, %s349
          %s351 = smul.addr %s20, 8
          %s352 = smul.addr %s351, 128
          %s353 = scalar_lea.hbm %s2, %s352
          %s354 = sshll.u32 %s344, 4
          %s355 = int_to_ptr.vmem [resolvable:$true] %s354
          %360 = dma.vmem_to_hbm [thread:$0]  %s355, 1024, %s353, %s341, 256, 256, 16
        $region40: #{tpu_custom_call.1} parent=27 // pred_fallthru
          _
      $region28: #{tpu_custom_call.1} parent=5 // pred_fallthru
        _
      %p361 = scmp.le.s32.totalorder 2, %s15
      // Predicated region
      $region41: #{tpu_custom_call.1} parent=5 // pred_check
        %p362 = pneg %p361
      $region42: #{tpu_custom_call.1} parent=5 // pred_check_branch
        %364 = sbr.rel (%p362) target = $region44
      $region43: #{tpu_custom_call.1} parent=5 // pred_region
        %s365 = ssub.s32 %s15, 2
        // Predicated region
        $region45: #{tpu_custom_call.1} parent=43 // pred_check
          %p366 = pneg %p91
        $region46: #{tpu_custom_call.1} parent=43 // pred_check_branch
          %368 = sbr.rel (%p366) target = $region48
        $region47: #{tpu_custom_call.1} parent=43 // pred_region
          %s369 = sand.u32 %s76, 1
          %s370 = scalar_lea.sflag [#allocation4], %s369
          %s371 = sand.u32 %s76, 1
          %s372 = smul.addr %s371, 64
          %s373 = scalar_lea.vmem [#allocation7], %s372
          %374 = dma.done %s370, 1024
        $region48: #{tpu_custom_call.1} parent=43 // pred_fallthru
          _
      $region44: #{tpu_custom_call.1} parent=5 // pred_fallthru
        _
    $region6: #{tpu_custom_call.1} parent=1 // loop_footer
      %s19 = sadd.s32 1, %s15
    $region7: #{tpu_custom_call.1} parent=1 // loop_footer_branch
      %14 = sbr.rel target = $region3
    $region8: #{tpu_custom_call.1} parent=1 // loop_exit
      _
    %375 = vsyncpa [#allocation3], 1
    %s376 = scalar_lea.sflag [#allocation3], 1
    %377 = vsyncpa %s376, 1
    %378 = vsyncpa [#allocation4], 1
    %s379 = scalar_lea.sflag [#allocation4], 1
    %380 = vsyncpa %s379, 1
    %381 = vsyncpa [#allocation5], 1
    %s382 = scalar_lea.sflag [#allocation5], 1
    %383 = vsyncpa %s382, 1

</llo_original>
